<compile_context>
chip_gen: v5e
topology: v5e:2x2
jax: 0.10.0
libtpu: 0.0.40
codegen_flags: <defaults>
</compile_context>

<pallas_src>
import jax
import jax.numpy as jnp
from jax.experimental import pallas as pl
from jax.experimental.pallas import tpu as pltpu

# quint8 defaults (torch.ao FakeQuantize, per-tensor affine, no reduce_range)
QUANT_MIN = 0.0
QUANT_MAX = 255.0

SUBLANE = 8                       # f32 sublane granularity
TILE_BYTES = 4 * 1024 * 1024      # ~4 MiB per block (input and output each)
VMEM_LIMIT = 40 * 1024 * 1024     # explicit scoped-VMEM budget, safe on v5e/v6e/v7x


def _fake_quant_kernel(scale_ref, zp_ref, x_ref, o_ref):
    # scale_ref / zp_ref are scalar-prefetch SMEM refs (shape (1,)).
    scale = scale_ref[0]
    zp = zp_ref[0].astype(jnp.float32)
    # Fold zero_point into the clamp bounds (scalar math, hoisted by compiler).
    lo = QUANT_MIN - zp
    hi = QUANT_MAX - zp
    # TODO(synk): torch's observer guarantees scale >= eps; if raw observer
    # output could ever be 0, add a jnp.maximum(scale, tiny) guard here.
    x = x_ref[...].astype(jnp.float32)
    # round-half-to-even matches torch's nearbyint; division (not x * (1/scale))
    # matches torch's round(x / scale) exactly on rounding boundaries.
    q = jnp.clip(jnp.round(x / scale), lo, hi)
    o_ref[...] = (q * scale).astype(o_ref.dtype)


def _fake_quant_jax(x, scale, zero_point):
    """Plain-XLA fallback for tiny activations (fused elementwise beats a
    kernel launch at KiB scale)."""
    s = scale[0]
    zp = zero_point[0].astype(jnp.float32)
    q = jnp.clip(jnp.round(x / s) + zp, QUANT_MIN, QUANT_MAX)
    return ((q - zp) * s).astype(x.dtype)


def _choose_lane(total):
    """Largest lane-dense width (multiple of 128) making the reshape zero-copy."""
    for lane in (1024, 512, 256, 128):
        if total % lane == 0:
            return lane, 0
    lane = 128                         # last resort: pad only to one ragged row
    return lane, (-total) % lane


def _row_tile(rows, lane):
    """Rows per block: ~TILE_BYTES, multiple of 8, and at least 2 (even) grid
    steps whenever rows > 8 so v7x's two TensorCores both get work."""
    if rows <= SUBLANE:
        return rows                    # full-extent block (any size is legal)
    target = max(SUBLANE, TILE_BYTES // (lane * 4))   # multiple of 8
    nsteps = max(2, pl.cdiv(rows, target))
    if nsteps % 2:
        nsteps += 1                    # even step count -> balanced TC split
    tr = ((pl.cdiv(rows, nsteps) + SUBLANE - 1) // SUBLANE) * SUBLANE
    return min(tr, target)


def master_fake_quantize(x, scale, zero_point, *, min_pallas_elems=262144):
    """Eval-mode forward of MasterFakeQuantize (per-tensor affine fake-quant).

    Args:
      x:          float32 array, any shape (e.g. NCHW conv activation)
      scale:      float32 scalar array shape (1,)
      zero_point: int32 scalar array shape (1,)
      min_pallas_elems: below this element count, use the fused XLA path.
    Returns:
      array of x.shape / x.dtype, fake-quantized per-tensor.
    """
    orig_shape = x.shape
    total = x.size
    if total < min_pallas_elems or total == 0:
        return _fake_quant_jax(x, scale, zero_point)

    lane, pad = _choose_lane(total)
    flat = x.reshape(-1)
    if pad:
        # Rare path: only when total is not a multiple of 128.
        flat = jnp.pad(flat, (0, pad))
    padded_total = total + pad
    rows = padded_total // lane
    x2d = flat.reshape(rows, lane)     # zero-copy bitcast when pad == 0

    tr = _row_tile(rows, lane)
    grid = (pl.cdiv(rows, tr),)        # ragged last block handled by Pallas

    cost = pl.CostEstimate(
        flops=6 * padded_total,
        transcendentals=0,
        bytes_accessed=8 * padded_total,   # 4 B read + 4 B write per element
    )

    out2d = pl.pallas_call(
        _fake_quant_kernel,
        out_shape=jax.ShapeDtypeStruct((rows, lane), x2d.dtype),
        grid_spec=pltpu.PrefetchScalarGridSpec(
            num_scalar_prefetch=2,
            grid=grid,
            in_specs=[
                pl.BlockSpec((tr, lane), lambda i, s, z: (i, 0)),
            ],
            out_specs=pl.BlockSpec((tr, lane), lambda i, s, z: (i, 0)),
        ),
        compiler_params=pltpu.CompilerParams(
            dimension_semantics=("parallel",),   # shard blocks across TCs on v7x
            vmem_limit_bytes=VMEM_LIMIT,
        ),
        # Donate the input slab as the output buffer (same shape/dtype);
        # index 2 counts the two scalar-prefetch operands.
        input_output_aliases={2: 0},
        cost_estimate=cost,
    )(scale, zero_point, x2d)

    if pad:
        return out2d.reshape(-1)[:total].reshape(orig_shape)
    return out2d.reshape(orig_shape)


def master_fake_quantize_ref(x, scale, zero_point):
    s = scale[0]
    zp = zero_point[0].astype(jnp.float32)
    q = jnp.clip(jnp.round(x / s) + zp, QUANT_MIN, QUANT_MAX)
    return (q - zp) * s


if __name__ == "__main__":
    k1, k2 = jax.random.split(jax.random.PRNGKey(0))

    # Deterministic qparams (FakeQuantize defaults: quint8, per-tensor affine).
    # TODO(synk): broadcast_qparam / observer state copying is module
    # bookkeeping with no tensor compute; not represented in the kernel.
    scale = jnp.array([0.05], dtype=jnp.float32)
    zero_point = jnp.array([128], dtype=jnp.int32)

    # (a) zero-copy path: 2048 elements divisible by 1024 -> (2, 1024) slab,
    #     single full-extent block, no pad, no tail slice.
    x1 = jax.random.normal(k1, (2, 4, 16, 16), dtype=jnp.float32)
    y1 = jax.block_until_ready(
        master_fake_quantize(x1, scale, zero_point, min_pallas_elems=0))
    assert y1.shape == x1.shape and y1.dtype == x1.dtype
    assert jnp.allclose(y1, master_fake_quantize_ref(x1, scale, zero_point),
                        atol=1e-6), "mismatch vs reference (aligned path)"

    # (b) ragged path: 2400 elements (not a multiple of 128) -> minimal pad to
    #     lane=128, rows=19, 2-step grid with a masked final block.
    x2 = jax.random.normal(k2, (2, 3, 20, 20), dtype=jnp.float32)
    y2 = jax.block_until_ready(
        master_fake_quantize(x2, scale, zero_point, min_pallas_elems=0))
    assert y2.shape == x2.shape and y2.dtype == x2.dtype
    assert jnp.allclose(y2, master_fake_quantize_ref(x2, scale, zero_point),
                        atol=1e-6), "mismatch vs reference (ragged path)"

    print("KERNEL_OK")
</pallas_src>

<mosaic_0001>
module attributes {stable_mosaic.version = 11 : i64} {
  func.func @_fake_quant_kernel(%arg0: i32, %arg1: memref<1xf32, #tpu.memory_space<smem>>, %arg2: memref<1xi32, #tpu.memory_space<smem>>, %arg3: memref<2x1024xf32, #tpu.memory_space<vmem>>, %arg4: memref<2x1024xf32, #tpu.memory_space<vmem>>) attributes {dimension_semantics = [#tpu.dimension_semantics<parallel>], iteration_bounds = array<i64: 1>, scalar_prefetch = 2 : i64, scratch_operands = 0 : i64, tpu.core_type = #tpu.core_type<tc>, window_params = [{transform_indices = @transform_0, window_bounds = array<i64: 2, 1024>}, {transform_indices = @transform_1, window_bounds = array<i64: 2, 1024>}]} {
    %c0 = arith.constant 0 : index
    %0 = memref.load %arg1[%c0] : memref<1xf32, #tpu.memory_space<smem>>
    %c0_0 = arith.constant 0 : index
    %1 = memref.load %arg2[%c0_0] : memref<1xi32, #tpu.memory_space<smem>>
    %2 = arith.sitofp %1 : i32 to f32
    %cst = arith.constant 0.000000e+00 : f32
    %3 = arith.subf %cst, %2 : f32
    %cst_1 = arith.constant 2.550000e+02 : f32
    %4 = arith.subf %cst_1, %2 : f32
    %c0_2 = arith.constant 0 : index
    %c0_3 = arith.constant 0 : index
    %5 = vector.load %arg3[%c0_2, %c0_3] : memref<2x1024xf32, #tpu.memory_space<vmem>>, vector<2x1024xf32>
    %6 = vector.broadcast %0 : f32 to vector<2x1024xf32>
    %7 = arith.divf %5, %6 : vector<2x1024xf32>
    %8 = math.roundeven %7 : vector<2x1024xf32>
    %9 = vector.broadcast %3 : f32 to vector<2x1024xf32>
    %10 = arith.maximumf %9, %8 : vector<2x1024xf32>
    %11 = vector.broadcast %4 : f32 to vector<2x1024xf32>
    %12 = arith.minimumf %11, %10 : vector<2x1024xf32>
    %13 = vector.broadcast %0 : f32 to vector<2x1024xf32>
    %14 = arith.mulf %12, %13 : vector<2x1024xf32>
    %c0_4 = arith.constant 0 : index
    %c0_5 = arith.constant 0 : index
    %15 = vector.load %arg4[%c0_4, %c0_5] : memref<2x1024xf32, #tpu.memory_space<vmem>>, vector<2x1024xf32>
    tpu.vector_store %arg4[%c0_4, %c0_5], %14 {strides = array<i32>} : memref<2x1024xf32, #tpu.memory_space<vmem>>, vector<2x1024xf32>,
    return
  }
  func.func @transform_0(%arg0: i32, %arg1: memref<1xf32, #tpu.memory_space<smem>>, %arg2: memref<1xi32, #tpu.memory_space<smem>>) -> (i32, i32) {
    %c0_i32 = arith.constant 0 : i32
    %c0_i32_0 = arith.constant 0 : i32
    return %arg0, %c0_i32 : i32, i32
  }
  func.func @transform_1(%arg0: i32, %arg1: memref<1xf32, #tpu.memory_space<smem>>, %arg2: memref<1xi32, #tpu.memory_space<smem>>) -> (i32, i32) {
    %c0_i32 = arith.constant 0 : i32
    %c0_i32_0 = arith.constant 0 : i32
    return %arg0, %c0_i32 : i32, i32
  }
}

</mosaic_0001>

<llo_original>
// kernel: tpu_custom_call.1
$region0: #{tpu_custom_call.1}
  #allocation0 [shape = 'u32[]', space=smem, size = 0x4, offset = 0x4, fixed_abs, tag = 'smem constant byte address 0x4 - core index']
  #allocation1 [shape = 'u32[72,128]{1,0:T(1,128)}', space=vmem, size = 0x9000, scoped, tag = 'internal scratch']
  #allocation2 [shape = 's32[1]{0}', space=sflag, size = 0x4, scoped, tag = 'scoped memory for tpu_custom_call.1']
  #allocation3 [shape = 'f32[1]{0:T(128)S(6)}', space=smem, size = 0x200, scoped, tag = 'prefetched SMEM operand 0']
  #allocation4 [shape = 's32[1]{0:T(128)S(6)}', space=smem, size = 0x200, scoped, tag = 'prefetched SMEM operand 1']
  %s0 = inlined_call_operand.<no memory space> [shape: f32[1], index: 0, kind: input, shape index: {}]
  %s1 = inlined_call_operand.<no memory space> [shape: s32[1], index: 1, kind: input, shape index: {}]
  %s2 = inlined_call_operand.hbm [shape: f32[2,1024], index: 2, kind: input, shape index: {}, may-alias: {2,3}]
  %s3 = inlined_call_operand.hbm [shape: f32[2,1024], index: 3, kind: output, shape index: {}, may-alias: {2,3}]
  %s4 = sld [smem:[#allocation0]]
  $region18: #{tpu_custom_call.1} parent=0
    _
  %s6 = ssub.s32 1, %s4
  %s7 = scalar_select 0, %s6, %s4
  %8 = sst [smem:[#allocation3]] %s0
  %9 = sst [smem:[#allocation4]] %s1
  $region1: #{tpu_custom_call.1} parent=0
    #allocation5 [shape = 'u8[8192]{0}', space=vmem, size = 0x2000, scoped, tag = 'input window, operand 2, single buffered']
    #allocation6 [shape = 's32[1]{0}', space=sflag, size = 0x4, scoped, tag = 'scoped memory for tpu_custom_call.1']
    #allocation7 [shape = 's32[1]{0}', space=sflag, size = 0x4, scoped, tag = 'scoped memory for tpu_custom_call.1']
    #allocation8 [shape = 'u8[8192]{0}', space=vmem, size = 0x2000, scoped, tag = 'output window, operand 0, single buffered']
    %10 = vsyncpa [#allocation6], 0
    %11 = vsyncpa [#allocation7], 0
    // Predicated region
    $region2: #{tpu_custom_call.1} parent=1 // pred_check
      _
    $region3: #{tpu_custom_call.1} parent=1 // pred_check_branch
      %13 = sbr.rel (0) target = $region5
    $region4: #{tpu_custom_call.1} parent=1 // pred_region
      %15 = vsyncadd [#allocation6], 0
      %s17 = sshll.u32 %s2, 4
      %s18 = int_to_ptr.hbm [resolvable:$true] %s17
      %s19 = sshll.u32 [#allocation5], 4
      %s20 = int_to_ptr.vmem [resolvable:$true] %s19
      %22 = dma.hbm_to_vmem [thread:$0]  %s18, 256, %s20, [#allocation6]
    $region5: #{tpu_custom_call.1} parent=1 // pred_fallthru
      _
    // Predicated region
    $region6: #{tpu_custom_call.1} parent=1 // pred_check
      _
    $region7: #{tpu_custom_call.1} parent=1 // pred_check_branch
      %24 = sbr.rel (0) target = $region9
    $region8: #{tpu_custom_call.1} parent=1 // pred_region
      %26 = dma.done [#allocation6], 256
    $region9: #{tpu_custom_call.1} parent=1 // pred_fallthru
      _
    %s27 = sld [smem:[#allocation3]]
    %s28 = sld [smem:[#allocation4]]
    %s29 = scvt.s32.f32 %s28
    %s30 = ssub.f32 0.0, %s29
    %s31 = ssub.f32 255.0, %s29
    %v32 = vld [vmem:[#allocation5] sm:$0xff]
    %v33 = vld [vmem:[#allocation5 + $0x8] sm:$0xff]
    %v34 = vstv %s27
    %v35 = vrcp.pop %v34
    %v36 = vmul.f32 %v34, %v35
    %v37 = vsub.f32 1.0, %v36
    %v38 = vmul.f32 %v35, %v37
    %v39 = vadd.f32 %v35, %v38
    %vm40 = vweird.f32 %v34
    %vm41 = vweird.f32 %v35
    %vm42 = vmor %vm40, %vm41
    %v43 = vsel %vm42, %v35, %v39
    %v44 = vand.u32 2147483647, %v34
    %vm45 = vcmp.eq.f32.partialorder %v44, 8.507059e+37
    %v46 = vand.u32 %v34, 2147483648
    %v47 = vor.u32 1.1754944e-38, %v46
    %v48 = vsel %vm45, %v47, %v43
    %v49 = vmul.f32 %v32, %v48
    %v50 = vmul.f32 %v33, %v48
    %v51 = vround.ne.pseudo %v49
    %v52 = vround.ne.pseudo %v50
    %v53 = vstv %s30
    %v54 = vmax.f32 %v53, %v51
    %v55 = vmax.f32 %v53, %v52
    %v56 = vstv %s31
    %v57 = vmin.f32 %v56, %v54
    %v58 = vmin.f32 %v56, %v55
    %v59 = vmul.f32 %v57, %v34
    %v60 = vmul.f32 %v58, %v34
    %61 = vst [vmem:[#allocation8] sm:$0xff] %v59
    %62 = vst [vmem:[#allocation8 + $0x8] sm:$0xff] %v60
    // Predicated region
    $region10: #{tpu_custom_call.1} parent=1 // pred_check
      _
    $region11: #{tpu_custom_call.1} parent=1 // pred_check_branch
      %64 = sbr.rel (0) target = $region13
    $region12: #{tpu_custom_call.1} parent=1 // pred_region
      %66 = vsyncadd [#allocation7], 0
      %s68 = sshll.u32 [#allocation8], 4
      %s69 = int_to_ptr.vmem [resolvable:$true] %s68
      %s70 = sshll.u32 %s3, 4
      %s71 = int_to_ptr.hbm [resolvable:$true] %s70
      %73 = dma.vmem_to_hbm [thread:$0]  %s69, 256, %s71, [#allocation7]
    $region13: #{tpu_custom_call.1} parent=1 // pred_fallthru
      _
    // Predicated region
    $region14: #{tpu_custom_call.1} parent=1 // pred_check
      _
    $region15: #{tpu_custom_call.1} parent=1 // pred_check_branch
      %75 = sbr.rel (0) target = $region17
    $region16: #{tpu_custom_call.1} parent=1 // pred_region
      %77 = dma.done [#allocation7], 256
    $region17: #{tpu_custom_call.1} parent=1 // pred_fallthru
      _
    %78 = vsyncpa [#allocation6], 1
    %79 = vsyncpa [#allocation7], 1

</llo_original>
